<compile_context>
chip_gen: v6e
topology: v6e:2x2x1
jax: 0.10.0
libtpu: 0.0.40
codegen_flags: <defaults>
</compile_context>

<pallas_src>
import functools

import jax
import jax.numpy as jnp
import numpy as np
from jax.experimental import pallas as pl
from jax.experimental.pallas import tpu as pltpu


# ---------------------------------------------------------------------------
# Kernels (all operate on one batch element: (C, L) tiles, L on lanes)
# ---------------------------------------------------------------------------
def conv1_kernel(xcols_ref, w1_ref, wd_ref, bd_ref,
                 y1_ref, res_ref, s1_ref, q1_ref, *, last_tap):
    """conv1 (single im2col matmul) + 1x1 residual conv + BN1 partial sums."""
    xcols = xcols_ref[...]                                          # (K*Cin, L)
    y1 = jnp.dot(w1_ref[...], xcols, preferred_element_type=jnp.float32)  # (Cout, L)
    y1_ref[...] = y1
    # partial BatchNorm1 statistics over the time axis (finished in the wrapper)
    s1_ref[...] = jnp.sum(y1, axis=-1, keepdims=True)
    q1_ref[...] = jnp.sum(y1 * y1, axis=-1, keepdims=True)
    # residual branch: the last im2col tap is exactly the un-padded input x
    x_last = xcols[last_tap:, :]                                    # (Cin, L)
    res_ref[...] = (jnp.dot(wd_ref[...], x_last, preferred_element_type=jnp.float32)
                    + bd_ref[...])


def conv2_kernel(y1_ref, a1_ref, c1_ref, w2_ref,
                 y2_ref, s2_ref, q2_ref, *, K, dilation, padding):
    """BN1 affine + ReLU, causal im2col in registers, conv2 matmul, BN2 partials."""
    y1 = y1_ref[...]                                                # (Cout, L) f32
    h1 = jnp.maximum(y1 * a1_ref[...] + c1_ref[...], 0.0)           # BN1 + ReLU
    # TODO(synk): dropout1 treated as identity (no RNG-matched mask).
    cout, L = h1.shape
    h1 = h1.astype(w2_ref.dtype)
    # Build the causal (left-zero-padded) im2col directly from h1 — no padded
    # VMEM scratch, no round-trip store/load.  tap_k[t] = h1[t - shift_k].
    taps = []
    for k in range(K):
        shift = padding - k * dilation                              # (K-1-k)*dilation
        if shift == 0:
            taps.append(h1)
        elif shift >= L:
            taps.append(jnp.zeros_like(h1))
        else:
            zeros = jnp.zeros((cout, shift), h1.dtype)
            taps.append(jnp.concatenate([zeros, h1[:, :L - shift]], axis=1))
    cols = jnp.concatenate(taps, axis=0)                            # (K*Cout, L)
    y2 = jnp.dot(w2_ref[...], cols, preferred_element_type=jnp.float32)   # (Cout, L)
    y2_ref[...] = y2
    s2_ref[...] = jnp.sum(y2, axis=-1, keepdims=True)
    q2_ref[...] = jnp.sum(y2 * y2, axis=-1, keepdims=True)


def finalize_kernel(y2_ref, res_ref, a2_ref, c2_ref, out_ref):
    """BN2 affine + ReLU, residual add, final ReLU."""
    h2 = jnp.maximum(y2_ref[...] * a2_ref[...] + c2_ref[...], 0.0)
    # TODO(synk): dropout2 treated as identity.
    out_ref[...] = jnp.maximum(h2 + res_ref[...], 0.0)


# ---------------------------------------------------------------------------
# Wrapper
# ---------------------------------------------------------------------------
def weight_norm_weight(v, g):
    # PyTorch weight_norm(dim=0): per-output-channel L2 norm over (in_ch, k).
    norm = jnp.sqrt(jnp.sum(v * v, axis=(1, 2), keepdims=True))
    return g * v / norm


def _cparams(per_step_bytes):
    # Double-buffered blocks + headroom, clamped to v7x physical VMEM (64 MiB).
    limit = int(min(max(2 * per_step_bytes + (4 << 20), 32 << 20), 64 << 20))
    return pltpu.CompilerParams(dimension_semantics=("parallel",),
                                vmem_limit_bytes=limit)


def temporal_block(x, params, *, kernel_size, dilation, padding, eps=1e-5,
                   compute_dtype=jnp.float32):
    """x: (B, C_in, L) PyTorch NCL layout. Returns (B, C_out, L).

    compute_dtype=jnp.bfloat16 is recommended on v6e/v7x (MXU-native); all
    post-matmul BatchNorm / ReLU / residual math stays in float32.
    """
    B, Cin, L = x.shape
    K = kernel_size
    Cout = params['conv1_v'].shape[0]
    n = B * L

    w1 = weight_norm_weight(params['conv1_v'], params['conv1_g'])   # (Cout, Cin, K)
    w2 = weight_norm_weight(params['conv2_v'], params['conv2_g'])   # (Cout, Cout, K)
    # im2col weight layouts: w*r[o, k*C + c] == w*[o, c, k]
    w1r = jnp.transpose(w1, (0, 2, 1)).reshape(Cout, K * Cin).astype(compute_dtype)
    w2r = jnp.transpose(w2, (0, 2, 1)).reshape(Cout, K * Cout).astype(compute_dtype)
    wd = params['down_w'][:, :, 0].astype(compute_dtype)            # (Cout, Cin)
    bd = params['down_b'].reshape(Cout, 1).astype(jnp.float32)

    # causal im2col for conv1, built once in the wrapper (x stays NCL: L on lanes)
    xpad = jnp.pad(x, ((0, 0), (0, 0), (padding, 0)))
    x_cols = jnp.concatenate(
        [xpad[:, :, k * dilation:k * dilation + L] for k in range(K)],
        axis=1).astype(compute_dtype)                               # (B, K*Cin, L)

    isz = jnp.dtype(compute_dtype).itemsize
    f32 = 4
    full = lambda shape: pl.BlockSpec(shape, lambda b, _s=shape: (0,) * len(_s))
    perb = lambda *tail: pl.BlockSpec((None,) + tail,
                                      lambda b, _t=tail: (b,) + (0,) * len(_t))

    # ---- kernel 1: conv1 + residual + BN1 partial sums ---------------------
    step1 = (K * Cin * L + Cout * K * Cin + Cout * Cin) * isz \
        + (3 * Cout * L + 3 * Cout) * f32
    y1, res, s1, q1 = pl.pallas_call(
        functools.partial(conv1_kernel, last_tap=(K - 1) * Cin),
        grid=(B,),
        in_specs=[perb(K * Cin, L), full((Cout, K * Cin)),
                  full((Cout, Cin)), full((Cout, 1))],
        out_specs=[perb(Cout, L), perb(Cout, L), perb(Cout, 1), perb(Cout, 1)],
        out_shape=[jax.ShapeDtypeStruct((B, Cout, L), jnp.float32),
                   jax.ShapeDtypeStruct((B, Cout, L), jnp.float32),
                   jax.ShapeDtypeStruct((B, Cout, 1), jnp.float32),
                   jax.ShapeDtypeStruct((B, Cout, 1), jnp.float32)],
        compiler_params=_cparams(step1),
    )(x_cols, w1r, wd, bd)

    # ---- BatchNorm1 (training-mode batch stats) folded into per-ch affine --
    mean1 = jnp.sum(s1, axis=(0, 2)) / n
    var1 = jnp.maximum(jnp.sum(q1, axis=(0, 2)) / n - mean1 * mean1, 0.0)
    inv1 = params['bn1_g'] * jax.lax.rsqrt(var1 + eps)
    a1 = inv1.reshape(Cout, 1).astype(jnp.float32)
    c1 = (params['bn1_b'] - mean1 * inv1).reshape(Cout, 1).astype(jnp.float32)

    # ---- kernel 2: BN1+ReLU, conv2, BN2 partial sums ------------------------
    step2 = (Cout * K * Cout) * isz + (2 * Cout * L + K * Cout * L + 4 * Cout) * f32
    y2, s2, q2 = pl.pallas_call(
        functools.partial(conv2_kernel, K=K, dilation=dilation, padding=padding),
        grid=(B,),
        in_specs=[perb(Cout, L), full((Cout, 1)), full((Cout, 1)),
                  full((Cout, K * Cout))],
        out_specs=[perb(Cout, L), perb(Cout, 1), perb(Cout, 1)],
        out_shape=[jax.ShapeDtypeStruct((B, Cout, L), jnp.float32),
                   jax.ShapeDtypeStruct((B, Cout, 1), jnp.float32),
                   jax.ShapeDtypeStruct((B, Cout, 1), jnp.float32)],
        compiler_params=_cparams(step2),
    )(y1, a1, c1, w2r)

    mean2 = jnp.sum(s2, axis=(0, 2)) / n
    var2 = jnp.maximum(jnp.sum(q2, axis=(0, 2)) / n - mean2 * mean2, 0.0)
    inv2 = params['bn2_g'] * jax.lax.rsqrt(var2 + eps)
    a2 = inv2.reshape(Cout, 1).astype(jnp.float32)
    c2 = (params['bn2_b'] - mean2 * inv2).reshape(Cout, 1).astype(jnp.float32)

    # ---- kernel 3: BN2 + ReLU + residual + final ReLU ------------------------
    step3 = (3 * Cout * L + 2 * Cout) * f32
    out = pl.pallas_call(
        finalize_kernel,
        grid=(B,),
        in_specs=[perb(Cout, L), perb(Cout, L), full((Cout, 1)), full((Cout, 1))],
        out_specs=perb(Cout, L),
        out_shape=jax.ShapeDtypeStruct((B, Cout, L), jnp.float32),
        compiler_params=_cparams(step3),
    )(y2, res, a2, c2)
    return out                                                       # (B, Cout, L)


# ---------------------------------------------------------------------------
# Pure-JAX reference mirroring the PyTorch module (pad-both-sides + chomp)
# ---------------------------------------------------------------------------
def reference(x, params, *, kernel_size, dilation, padding, eps=1e-5):
    w1 = weight_norm_weight(params['conv1_v'], params['conv1_g'])
    w2 = weight_norm_weight(params['conv2_v'], params['conv2_g'])

    def conv1d(h, w, b):
        y = jax.lax.conv_general_dilated(
            h, w, window_strides=(1,), padding=[(padding, padding)],
            rhs_dilation=(dilation,), dimension_numbers=('NCH', 'OIH', 'NCH'))
        return y + b[None, :, None]

    def chomp(h):
        return h[:, :, :-padding] if padding > 0 else h

    def bn(h, g, b):
        m = jnp.mean(h, axis=(0, 2), keepdims=True)
        v = jnp.mean((h - m) ** 2, axis=(0, 2), keepdims=True)
        return (h - m) * jax.lax.rsqrt(v + eps) * g[None, :, None] + b[None, :, None]

    h = chomp(conv1d(x, w1, params['conv1_b']))                      # conv1 + chomp1
    h = jnp.maximum(bn(h, params['bn1_g'], params['bn1_b']), 0.0)    # bn1 + relu1
    h = chomp(conv1d(h, w2, params['conv2_b']))                      # conv2 + chomp2
    h = jnp.maximum(bn(h, params['bn2_g'], params['bn2_b']), 0.0)    # bn2 + relu2
    res = jax.lax.conv_general_dilated(
        x, params['down_w'], window_strides=(1,), padding=[(0, 0)],
        dimension_numbers=('NCH', 'OIH', 'NCH')) + params['down_b'][None, :, None]
    return jnp.maximum(h + res, 0.0)


if __name__ == "__main__":
    B, Cin, Cout, L = 2, 4, 8, 128
    K, stride, dilation = 3, 1, 2
    padding = (K - 1) * dilation              # = 4, standard causal TCN padding

    key = jax.random.PRNGKey(0)
    ks = jax.random.split(key, 13)
    params = dict(
        conv1_v=0.01 * jax.random.normal(ks[0], (Cout, Cin, K), jnp.float32),
        conv1_g=jax.random.uniform(ks[1], (Cout, 1, 1), jnp.float32, 0.5, 1.5),
        conv1_b=0.1 * jax.random.normal(ks[2], (Cout,), jnp.float32),
        bn1_g=jax.random.uniform(ks[3], (Cout,), jnp.float32, 0.5, 1.5),
        bn1_b=0.1 * jax.random.normal(ks[4], (Cout,), jnp.float32),
        conv2_v=0.01 * jax.random.normal(ks[5], (Cout, Cout, K), jnp.float32),
        conv2_g=jax.random.uniform(ks[6], (Cout, 1, 1), jnp.float32, 0.5, 1.5),
        conv2_b=0.1 * jax.random.normal(ks[7], (Cout,), jnp.float32),
        bn2_g=jax.random.uniform(ks[8], (Cout,), jnp.float32, 0.5, 1.5),
        bn2_b=0.1 * jax.random.normal(ks[9], (Cout,), jnp.float32),
        down_w=0.01 * jax.random.normal(ks[10], (Cout, Cin, 1), jnp.float32),
        down_b=0.1 * jax.random.normal(ks[11], (Cout,), jnp.float32),
    )
    x = jax.random.normal(ks[12], (B, Cin, L), jnp.float32)

    out = jax.block_until_ready(
        temporal_block(x, params, kernel_size=K, dilation=dilation, padding=padding))
    ref = jax.block_until_ready(
        reference(x, params, kernel_size=K, dilation=dilation, padding=padding))

    assert out.shape == (B, Cout, L)
    np.testing.assert_allclose(np.asarray(out), np.asarray(ref), rtol=1e-4, atol=1e-4)

    # bf16 matmul-operand variant (recommended on v6e / v7x); elementwise math
    # stays f32 — just check it runs and produces finite values.
    out_bf16 = jax.block_until_ready(
        temporal_block(x, params, kernel_size=K, dilation=dilation,
                       padding=padding, compute_dtype=jnp.bfloat16))
    assert out_bf16.shape == (B, Cout, L)
    assert bool(jnp.all(jnp.isfinite(out_bf16)))

    print("KERNEL_OK")
</pallas_src>

<mosaic_0001>
module attributes {stable_mosaic.version = 11 : i64} {
  func.func @conv1_kernel(%arg0: i32, %arg1: memref<1x12x128xf32, #tpu.memory_space<vmem>>, %arg2: memref<8x12xf32, #tpu.memory_space<vmem>>, %arg3: memref<8x4xf32, #tpu.memory_space<vmem>>, %arg4: memref<8x1xf32, #tpu.memory_space<vmem>>, %arg5: memref<1x8x128xf32, #tpu.memory_space<vmem>>, %arg6: memref<1x8x128xf32, #tpu.memory_space<vmem>>, %arg7: memref<1x8x1xf32, #tpu.memory_space<vmem>>, %arg8: memref<1x8x1xf32, #tpu.memory_space<vmem>>) attributes {dimension_semantics = [#tpu.dimension_semantics<parallel>], iteration_bounds = array<i64: 2>, scalar_prefetch = 0 : i64, scratch_operands = 0 : i64, tpu.core_type = #tpu.core_type<tc>, window_params = [{transform_indices = @transform_0, window_bounds = array<i64: 1, 12, 128>}, {pipeline_mode = #tpu.pipeline_mode<synchronous>, transform_indices = @transform_1, window_bounds = array<i64: 8, 12>}, {pipeline_mode = #tpu.pipeline_mode<synchronous>, transform_indices = @transform_2, window_bounds = array<i64: 8, 4>}, {pipeline_mode = #tpu.pipeline_mode<synchronous>, transform_indices = @transform_3, window_bounds = array<i64: 8, 1>}, {transform_indices = @transform_4, window_bounds = array<i64: 1, 8, 128>}, {transform_indices = @transform_5, window_bounds = array<i64: 1, 8, 128>}, {transform_indices = @transform_6, window_bounds = array<i64: 1, 8, 1>}, {transform_indices = @transform_7, window_bounds = array<i64: 1, 8, 1>}]} {
    %c0 = arith.constant 0 : index
    %c0_0 = arith.constant 0 : index
    %c0_1 = arith.constant 0 : index
    %0 = vector.load %arg1[%c0, %c0_0, %c0_1] : memref<1x12x128xf32, #tpu.memory_space<vmem>>, vector<1x12x128xf32>
    %1 = vector.shape_cast %0 : vector<1x12x128xf32> to vector<12x128xf32>
    %c0_2 = arith.constant 0 : index
    %c0_3 = arith.constant 0 : index
    %2 = vector.load %arg2[%c0_2, %c0_3] : memref<8x12xf32, #tpu.memory_space<vmem>>, vector<8x12xf32>
    %cst = arith.constant dense<0.000000e+00> : vector<8x128xf32>
    %3 = tpu.matmul %2, %1, %cst {dimension_numbers = #tpu.dot_dimension_numbers<[1], [0], [0], [1], [0, 0, 1, 1], [], []>} : vector<8x12xf32>, vector<12x128xf32>, vector<8x128xf32> -> vector<8x128xf32>
    %c0_4 = arith.constant 0 : index
    %c0_5 = arith.constant 0 : index
    %c0_6 = arith.constant 0 : index
    %4 = vector.load %arg5[%c0_4, %c0_5, %c0_6] : memref<1x8x128xf32, #tpu.memory_space<vmem>>, vector<1x8x128xf32>
    %5 = vector.shape_cast %4 : vector<1x8x128xf32> to vector<8x128xf32>
    %6 = vector.shape_cast %3 : vector<8x128xf32> to vector<1x8x128xf32>
    tpu.vector_store %arg5[%c0_4, %c0_5, %c0_6], %6 {strides = array<i32>} : memref<1x8x128xf32, #tpu.memory_space<vmem>>, vector<1x8x128xf32>,
    %cst_7 = arith.constant dense<0.000000e+00> : vector<8xf32>
    %7 = vector.multi_reduction <add>, %3, %cst_7 [1] : vector<8x128xf32> to vector<8xf32>
    %8 = vector.shape_cast %7 : vector<8xf32> to vector<8x1xf32>
    %c0_8 = arith.constant 0 : index
    %c0_9 = arith.constant 0 : index
    %c0_10 = arith.constant 0 : index
    %9 = vector.load %arg7[%c0_8, %c0_9, %c0_10] : memref<1x8x1xf32, #tpu.memory_space<vmem>>, vector<1x8x1xf32>
    %10 = vector.shape_cast %9 : vector<1x8x1xf32> to vector<8x1xf32>
    %11 = vector.shape_cast %8 : vector<8x1xf32> to vector<1x8x1xf32>
    tpu.vector_store %arg7[%c0_8, %c0_9, %c0_10], %11 {strides = array<i32>} : memref<1x8x1xf32, #tpu.memory_space<vmem>>, vector<1x8x1xf32>,
    %12 = arith.mulf %3, %3 : vector<8x128xf32>
    %cst_11 = arith.constant dense<0.000000e+00> : vector<8xf32>
    %13 = vector.multi_reduction <add>, %12, %cst_11 [1] : vector<8x128xf32> to vector<8xf32>
    %14 = vector.shape_cast %13 : vector<8xf32> to vector<8x1xf32>
    %c0_12 = arith.constant 0 : index
    %c0_13 = arith.constant 0 : index
    %c0_14 = arith.constant 0 : index
    %15 = vector.load %arg8[%c0_12, %c0_13, %c0_14] : memref<1x8x1xf32, #tpu.memory_space<vmem>>, vector<1x8x1xf32>
    %16 = vector.shape_cast %15 : vector<1x8x1xf32> to vector<8x1xf32>
    %17 = vector.shape_cast %14 : vector<8x1xf32> to vector<1x8x1xf32>
    tpu.vector_store %arg8[%c0_12, %c0_13, %c0_14], %17 {strides = array<i32>} : memref<1x8x1xf32, #tpu.memory_space<vmem>>, vector<1x8x1xf32>,
    %18 = vector.extract_strided_slice %1 {offsets = [8, 0], sizes = [4, 128], strides = [1, 1]} : vector<12x128xf32> to vector<4x128xf32>
    %c0_15 = arith.constant 0 : index
    %c0_16 = arith.constant 0 : index
    %19 = vector.load %arg3[%c0_15, %c0_16] : memref<8x4xf32, #tpu.memory_space<vmem>>, vector<8x4xf32>
    %cst_17 = arith.constant dense<0.000000e+00> : vector<8x128xf32>
    %20 = tpu.matmul %19, %18, %cst_17 {dimension_numbers = #tpu.dot_dimension_numbers<[1], [0], [0], [1], [0, 0, 1, 1], [], []>} : vector<8x4xf32>, vector<4x128xf32>, vector<8x128xf32> -> vector<8x128xf32>
    %c0_18 = arith.constant 0 : index
    %c0_19 = arith.constant 0 : index
    %21 = vector.load %arg4[%c0_18, %c0_19] : memref<8x1xf32, #tpu.memory_space<vmem>>, vector<8x1xf32>
    %22 = vector.broadcast %21 : vector<8x1xf32> to vector<8x128xf32>
    %23 = arith.addf %20, %22 : vector<8x128xf32>
    %c0_20 = arith.constant 0 : index
    %c0_21 = arith.constant 0 : index
    %c0_22 = arith.constant 0 : index
    %24 = vector.load %arg6[%c0_20, %c0_21, %c0_22] : memref<1x8x128xf32, #tpu.memory_space<vmem>>, vector<1x8x128xf32>
    %25 = vector.shape_cast %24 : vector<1x8x128xf32> to vector<8x128xf32>
    %26 = vector.shape_cast %23 : vector<8x128xf32> to vector<1x8x128xf32>
    tpu.vector_store %arg6[%c0_20, %c0_21, %c0_22], %26 {strides = array<i32>} : memref<1x8x128xf32, #tpu.memory_space<vmem>>, vector<1x8x128xf32>,
    return
  }
  func.func @transform_0(%arg0: i32) -> (i32, i32, i32) {
    %c0_i32 = arith.constant 0 : i32
    %c0_i32_0 = arith.constant 0 : i32
    %c0_i32_1 = arith.constant 0 : i32
    return %arg0, %c0_i32, %c0_i32_0 : i32, i32, i32
  }
  func.func @transform_1(%arg0: i32) -> (i32, i32) {
    %c0_i32 = arith.constant 0 : i32
    %c0_i32_0 = arith.constant 0 : i32
    %c0_i32_1 = arith.constant 0 : i32
    return %c0_i32, %c0_i32_0 : i32, i32
  }
  func.func @transform_2(%arg0: i32) -> (i32, i32) {
    %c0_i32 = arith.constant 0 : i32
    %c0_i32_0 = arith.constant 0 : i32
    %c0_i32_1 = arith.constant 0 : i32
    return %c0_i32, %c0_i32_0 : i32, i32
  }
  func.func @transform_3(%arg0: i32) -> (i32, i32) {
    %c0_i32 = arith.constant 0 : i32
    %c0_i32_0 = arith.constant 0 : i32
    %c0_i32_1 = arith.constant 0 : i32
    return %c0_i32, %c0_i32_0 : i32, i32
  }
  func.func @transform_4(%arg0: i32) -> (i32, i32, i32) {
    %c0_i32 = arith.constant 0 : i32
    %c0_i32_0 = arith.constant 0 : i32
    %c0_i32_1 = arith.constant 0 : i32
    return %arg0, %c0_i32, %c0_i32_0 : i32, i32, i32
  }
  func.func @transform_5(%arg0: i32) -> (i32, i32, i32) {
    %c0_i32 = arith.constant 0 : i32
    %c0_i32_0 = arith.constant 0 : i32
    %c0_i32_1 = arith.constant 0 : i32
    return %arg0, %c0_i32, %c0_i32_0 : i32, i32, i32
  }
  func.func @transform_6(%arg0: i32) -> (i32, i32, i32) {
    %c0_i32 = arith.constant 0 : i32
    %c0_i32_0 = arith.constant 0 : i32
    %c0_i32_1 = arith.constant 0 : i32
    return %arg0, %c0_i32, %c0_i32_0 : i32, i32, i32
  }
  func.func @transform_7(%arg0: i32) -> (i32, i32, i32) {
    %c0_i32 = arith.constant 0 : i32
    %c0_i32_0 = arith.constant 0 : i32
    %c0_i32_1 = arith.constant 0 : i32
    return %arg0, %c0_i32, %c0_i32_0 : i32, i32, i32
  }
}

</mosaic_0001>

<llo_original>
// kernel: tpu_custom_call.1
$region0: #{tpu_custom_call.1}
  #allocation0 [shape = 'u32[]', space=smem, size = 0x4, offset = 0x4, fixed_abs, tag = 'smem constant byte address 0x4 - core index']
  #allocation1 [shape = 'u32[144,128]{1,0:T(1,128)}', space=vmem, size = 0x12000, scoped, tag = 'internal scratch']
  %s0 = inlined_call_operand.vmem [shape: f32[2,12,128], index: 0, kind: input, shape index: {}]
  %s1 = inlined_call_operand.vmem [shape: f32[8,12], index: 1, kind: input, shape index: {}]
  %s2 = inlined_call_operand.vmem [shape: f32[8,4], index: 2, kind: input, shape index: {}]
  %s3 = inlined_call_operand.vmem [shape: f32[8,1], index: 3, kind: input, shape index: {}]
  %s4 = inlined_call_operand.hbm [shape: f32[2,8,128], index: 4, kind: output, shape index: {0}]
  %s5 = inlined_call_operand.hbm [shape: f32[2,8,128], index: 5, kind: output, shape index: {1}]
  %s6 = inlined_call_operand.vmem [shape: f32[2,8,1], index: 6, kind: output, shape index: {2}]
  %s7 = inlined_call_operand.vmem [shape: f32[2,8,1], index: 7, kind: output, shape index: {3}]
  %8 = xla_tuple %s4, %s5, %s6, %s7
  %s9 = sld [smem:[#allocation0]]
  $region73: #{tpu_custom_call.1} parent=0
    _
  %s11 = ssub.s32 1, %s9
  %s12 = scalar_select 0, %s11, %s9
  $region1: #{tpu_custom_call.1} parent=0
    #allocation2 [shape = 'u8[8192]{0}', space=vmem, size = 0x2000, scoped, tag = 'output window, operand 0']
    #allocation3 [shape = 's32[2]{0}', space=sflag, size = 0x8, scoped, tag = 'scoped memory for tpu_custom_call.1']
    #allocation4 [shape = 'u8[8192]{0}', space=vmem, size = 0x2000, scoped, tag = 'output window, operand 1']
    #allocation5 [shape = 's32[2]{0}', space=sflag, size = 0x8, scoped, tag = 'scoped memory for tpu_custom_call.1']
    %13 = vsyncpa [#allocation3], 0
    %s14 = scalar_lea.sflag [#allocation3], 1
    %15 = vsyncpa %s14, 0
    %16 = vsyncpa [#allocation5], 0
    %s17 = scalar_lea.sflag [#allocation5], 1
    %18 = vsyncpa %s17, 0
    loop: start=0, step=1, limit=4
    $region2: #{tpu_custom_call.1} parent=1 // loop_pre_header
      _
    $region3: #{tpu_custom_call.1} parent=1 // loop_header
      %s20 = sphi 0, %s24
      %p21 = scmp.ge.s32.totalorder %s20, 4
      %s30 = sphi 0, %s32
      %s33 = sphi 0, %s30
      %s34 = sphi 0, %s33
      %s50 = sphi 0, %s34
      %s54 = sphi 0, %s54
      %s56 = sphi 0, %s54
      %s57 = sphi 0, %s56
      %s71 = sphi 0, %s57
      %s75 = sphi 0, %s75
      %s77 = sphi 0, %s75
      %s78 = sphi 0, %s77
      %s92 = sphi 0, %s78
      %s96 = sphi 0, %s96
      %s98 = sphi 0, %s96
      %s99 = sphi 0, %s98
      %s113 = sphi 0, %s99
      %s119 = sphi 0, %s121
      %s122 = sphi 0, %s119
      %s123 = sphi 0, %s122
      %s139 = sphi 0, %s123
      %s145 = sphi 0, %s147
      %s148 = sphi 0, %s145
      %s149 = sphi 0, %s148
      %s165 = sphi 0, %s149
      %s171 = sphi 0, %s173
      %s174 = sphi 0, %s171
      %s175 = sphi 0, %s174
      %s191 = sphi 0, %s175
      %s197 = sphi 0, %s199
      %s200 = sphi 0, %s197
      %s201 = sphi 0, %s200
      %s217 = sphi 0, %s201
    $region4: #{tpu_custom_call.1} parent=1 // loop_header_branch
      %23 = sbr.rel (%p21) target = $region8
    $region5: #{tpu_custom_call.1} parent=1 // loop_body
      %s25 = ssub.s32 %s20, 1
      %s26 = ssub.s32 %s20, 2
      %s27 = sadd.s32 %s20, 1
      %s28 = ssub.s32 %s20, %s27
      %p29 = scmp.eq.s32.totalorder %s28, 0
      %s31 = sadd.s32 %s30, 1
      %s32 = scalar_select %p29, %s30, %s31
      %p35 = pneg %p29
      %p36 = scmp.eq.s32.totalorder %s20, 1
      %p37 = por %p35, %p36
      %p38 = scmp.ne.s32.totalorder %s30, %s33
      %p39 = scmp.eq.s32.totalorder %s20, 0
      %p40 = por %p38, %p39
      %p41 = scmp.ne.s32.totalorder %s30, %s33
      %p42 = scmp.eq.s32.totalorder %s25, 1
      %p43 = por %p41, %p42
      %p44 = scmp.ne.s32.totalorder %s33, %s34
      %p45 = scmp.eq.s32.totalorder %s25, 0
      %p46 = por %p44, %p45
      %p47 = scmp.ne.s32.totalorder %s33, %s34
      %p48 = scmp.eq.s32.totalorder %s26, 1
      %p49 = por %p47, %p48
      %p51 = scmp.ne.s32.totalorder %s34, %s50
      %p52 = scmp.eq.s32.totalorder %s26, 0
      %p53 = por %p51, %p52
      %s55 = sadd.s32 %s54, 1
      %p58 = scmp.eq.s32.totalorder %s20, 1
      %p59 = scmp.ne.s32.totalorder %s54, %s56
      %p60 = scmp.eq.s32.totalorder %s20, 0
      %p61 = por %p59, %p60
      %p62 = scmp.ne.s32.totalorder %s54, %s56
      %p63 = scmp.eq.s32.totalorder %s25, 1
      %p64 = por %p62, %p63
      %p65 = scmp.ne.s32.totalorder %s56, %s57
      %p66 = scmp.eq.s32.totalorder %s25, 0
      %p67 = por %p65, %p66
      %p68 = scmp.ne.s32.totalorder %s56, %s57
      %p69 = scmp.eq.s32.totalorder %s26, 1
      %p70 = por %p68, %p69
      %p72 = scmp.ne.s32.totalorder %s57, %s71
      %p73 = scmp.eq.s32.totalorder %s26, 0
      %p74 = por %p72, %p73
      %s76 = sadd.s32 %s75, 1
      %p79 = scmp.eq.s32.totalorder %s20, 1
      %p80 = scmp.ne.s32.totalorder %s75, %s77
      %p81 = scmp.eq.s32.totalorder %s20, 0
      %p82 = por %p80, %p81
      %p83 = scmp.ne.s32.totalorder %s75, %s77
      %p84 = scmp.eq.s32.totalorder %s25, 1
      %p85 = por %p83, %p84
      %p86 = scmp.ne.s32.totalorder %s77, %s78
      %p87 = scmp.eq.s32.totalorder %s25, 0
      %p88 = por %p86, %p87
      %p89 = scmp.ne.s32.totalorder %s77, %s78
      %p90 = scmp.eq.s32.totalorder %s26, 1
      %p91 = por %p89, %p90
      %p93 = scmp.ne.s32.totalorder %s78, %s92
      %p94 = scmp.eq.s32.totalorder %s26, 0
      %p95 = por %p93, %p94
      %s97 = sadd.s32 %s96, 1
      %p100 = scmp.eq.s32.totalorder %s20, 1
      %p101 = scmp.ne.s32.totalorder %s96, %s98
      %p102 = scmp.eq.s32.totalorder %s20, 0
      %p103 = por %p101, %p102
      %p104 = scmp.ne.s32.totalorder %s96, %s98
      %p105 = scmp.eq.s32.totalorder %s25, 1
      %p106 = por %p104, %p105
      %p107 = scmp.ne.s32.totalorder %s98, %s99
      %p108 = scmp.eq.s32.totalorder %s25, 0
      %p109 = por %p107, %p108
      %p110 = scmp.ne.s32.totalorder %s98, %s99
      %p111 = scmp.eq.s32.totalorder %s26, 1
      %p112 = por %p110, %p111
      %p114 = scmp.ne.s32.totalorder %s99, %s113
      %p115 = scmp.eq.s32.totalorder %s26, 0
      %p116 = por %p114, %p115
      %s117 = ssub.s32 %s20, %s27
      %p118 = scmp.eq.s32.totalorder %s117, 0
      %s120 = sadd.s32 %s119, 1
      %s121 = scalar_select %p118, %s119, %s120
      %p124 = pneg %p118
      %p125 = scmp.eq.s32.totalorder %s20, 1
      %p126 = por %p124, %p125
      %p127 = scmp.ne.s32.totalorder %s119, %s122
      %p128 = scmp.eq.s32.totalorder %s20, 0
      %p129 = por %p127, %p128
      %p130 = scmp.ne.s32.totalorder %s119, %s122
      %p131 = scmp.eq.s32.totalorder %s25, 1
      %p132 = por %p130, %p131
      %p133 = scmp.ne.s32.totalorder %s122, %s123
      %p134 = scmp.eq.s32.totalorder %s25, 0
      %p135 = por %p133, %p134
      %p136 = scmp.ne.s32.totalorder %s122, %s123
      %p137 = scmp.eq.s32.totalorder %s26, 1
      %p138 = por %p136, %p137
      %p140 = scmp.ne.s32.totalorder %s123, %s139
      %p141 = scmp.eq.s32.totalorder %s26, 0
      %p142 = por %p140, %p141
      %s143 = ssub.s32 %s20, %s27
      %p144 = scmp.eq.s32.totalorder %s143, 0
      %s146 = sadd.s32 %s145, 1
      %s147 = scalar_select %p144, %s145, %s146
      %p150 = pneg %p144
      %p151 = scmp.eq.s32.totalorder %s20, 1
      %p152 = por %p150, %p151
      %p153 = scmp.ne.s32.totalorder %s145, %s148
      %p154 = scmp.eq.s32.totalorder %s20, 0
      %p155 = por %p153, %p154
      %p156 = scmp.ne.s32.totalorder %s145, %s148
      %p157 = scmp.eq.s32.totalorder %s25, 1
      %p158 = por %p156, %p157
      %p159 = scmp.ne.s32.totalorder %s148, %s149
      %p160 = scmp.eq.s32.totalorder %s25, 0
      %p161 = por %p159, %p160
      %p162 = scmp.ne.s32.totalorder %s148, %s149
      %p163 = scmp.eq.s32.totalorder %s26, 1
      %p164 = por %p162, %p163
      %p166 = scmp.ne.s32.totalorder %s149, %s165
      %p167 = scmp.eq.s32.totalorder %s26, 0
      %p168 = por %p166, %p167
      %s169 = ssub.s32 %s20, %s27
      %p170 = scmp.eq.s32.totalorder %s169, 0
      %s172 = sadd.s32 %s171, 1
      %s173 = scalar_select %p170, %s171, %s172
      %p176 = pneg %p170
      %p177 = scmp.eq.s32.totalorder %s20, 1
      %p178 = por %p176, %p177
      %p179 = scmp.ne.s32.totalorder %s171, %s174
      %p180 = scmp.eq.s32.totalorder %s20, 0
      %p181 = por %p179, %p180
      %p182 = scmp.ne.s32.totalorder %s171, %s174
      %p183 = scmp.eq.s32.totalorder %s25, 1
      %p184 = por %p182, %p183
      %p185 = scmp.ne.s32.totalorder %s174, %s175
      %p186 = scmp.eq.s32.totalorder %s25, 0
      %p187 = por %p185, %p186
      %p188 = scmp.ne.s32.totalorder %s174, %s175
      %p189 = scmp.eq.s32.totalorder %s26, 1
      %p190 = por %p188, %p189
      %p192 = scmp.ne.s32.totalorder %s175, %s191
      %p193 = scmp.eq.s32.totalorder %s26, 0
      %p194 = por %p192, %p193
      %s195 = ssub.s32 %s20, %s27
      %p196 = scmp.eq.s32.totalorder %s195, 0
      %s198 = sadd.s32 %s197, 1
      %s199 = scalar_select %p196, %s197, %s198
      %p202 = pneg %p196
      %p203 = scmp.eq.s32.totalorder %s20, 1
      %p204 = por %p202, %p203
      %p205 = scmp.ne.s32.totalorder %s197, %s200
      %p206 = scmp.eq.s32.totalorder %s20, 0
      %p207 = por %p205, %p206
      %p208 = scmp.ne.s32.totalorder %s197, %s200
      %p209 = scmp.eq.s32.totalorder %s25, 1
      %p210 = por %p208, %p209
      %p211 = scmp.ne.s32.totalorder %s200, %s201
      %p212 = scmp.eq.s32.totalorder %s25, 0
      %p213 = por %p211, %p212
      %p214 = scmp.ne.s32.totalorder %s200, %s201
      %p215 = scmp.eq.s32.totalorder %s26, 1
      %p216 = por %p214, %p215
      %p218 = scmp.ne.s32.totalorder %s201, %s217
      %p219 = scmp.eq.s32.totalorder %s26, 0
      %p220 = por %p218, %p219
      %p221 = scmp.le.s32.totalorder 1, %s20
      %p222 = scmp.lt.s32.totalorder %s20, 3
      %p223 = pnand %p221, %p222
      %p224 = pneg %p223
      // Predicated region
      $region9: #{tpu_custom_call.1} parent=5 // pred_check
        _
      $region10: #{tpu_custom_call.1} parent=5 // pred_check_branch
        %226 = sbr.rel (%p223) target = $region12
      $region11: #{tpu_custom_call.1} parent=5 // pred_region
        %s227 = ssub.s32 %s20, 1
        // Predicated region
        $region13: #{tpu_custom_call.1} parent=11 // pred_check
          %p228 = pneg %p67
        $region14: #{tpu_custom_call.1} parent=11 // pred_check_branch
          %230 = sbr.rel (%p228) target = $region16
        $region15: #{tpu_custom_call.1} parent=11 // pred_region
          _
        $region16: #{tpu_custom_call.1} parent=11 // pred_fallthru
          _
        // Predicated region
        $region17: #{tpu_custom_call.1} parent=11 // pred_check
          %p231 = pneg %p88
        $region18: #{tpu_custom_call.1} parent=11 // pred_check_branch
          %233 = sbr.rel (%p231) target = $region20
        $region19: #{tpu_custom_call.1} parent=11 // pred_region
          _
        $region20: #{tpu_custom_call.1} parent=11 // pred_fallthru
          _
        // Predicated region
        $region21: #{tpu_custom_call.1} parent=11 // pred_check
          %p234 = pneg %p109
        $region22: #{tpu_custom_call.1} parent=11 // pred_check_branch
          %236 = sbr.rel (%p234) target = $region24
        $region23: #{tpu_custom_call.1} parent=11 // pred_region
          _
        $region24: #{tpu_custom_call.1} parent=11 // pred_fallthru
          _
      $region12: #{tpu_custom_call.1} parent=5 // pred_fallthru
        _
      %p237 = scmp.lt.s32.totalorder %s20, 2
      // Predicated region
      $region25: #{tpu_custom_call.1} parent=5 // pred_check
        %p238 = pneg %p237
      $region26: #{tpu_custom_call.1} parent=5 // pred_check_branch
        %240 = sbr.rel (%p238) target = $region28
      $region27: #{tpu_custom_call.1} parent=5 // pred_region
        // Predicated region
        $region29: #{tpu_custom_call.1} parent=27 // pred_check
          %p241 = pneg %p40
        $region30: #{tpu_custom_call.1} parent=27 // pred_check_branch
          %243 = sbr.rel (%p241) target = $region32
        $region31: #{tpu_custom_call.1} parent=27 // pred_region
          %p244 = scmp.lt.s32.totalorder %s20, 1
          %s245 = scalar_select %p244, %s20, 1
          %s246 = smul.addr %s245, 2
          %s247 = smul.addr %s246, 8
          %s248 = scalar_lea.vmem %s0, %s247
        $region32: #{tpu_custom_call.1} parent=27 // pred_fallthru
          _
      $region28: #{tpu_custom_call.1} parent=5 // pred_fallthru
        _
      %p249 = scmp.le.s32.totalorder 1, %s20
      %p250 = scmp.lt.s32.totalorder %s20, 3
      %p251 = pnand %p249, %p250
      %p252 = pneg %p251
      // Predicated region
      $region33: #{tpu_custom_call.1} parent=5 // pred_check
        _
      $region34: #{tpu_custom_call.1} parent=5 // pred_check_branch
        %254 = sbr.rel (%p251) target = $region36
      $region35: #{tpu_custom_call.1} parent=5 // pred_region
        %s255 = ssub.s32 %s20, 1
        %p256 = scmp.lt.s32.totalorder %s25, 1
        %s257 = scalar_select %p256, %s25, 1
        %s258 = smul.addr %s257, 2
        %s259 = smul.addr %s258, 8
        %s260 = scalar_lea.vmem %s0, %s259
        %p261 = pneg %p46
        %p262 = pneg %p43
        %p263 = pneg %p67
        %p264 = pneg %p64
        %p265 = pneg %p88
        %p266 = pneg %p85
        %p267 = pneg %p109
        %p268 = pneg %p106
        %p269 = pneg %p135
        %p270 = pneg %p132
        %s271 = sand.u32 %s122, 1
        %s272 = scalar_lea.sflag [#allocation3], %s271
        %s273 = sand.u32 %s122, 1
        %s274 = smul.addr %s273, 8
        %s275 = scalar_lea.vmem [#allocation2], %s274
        %p276 = pneg %p161
        %p277 = pneg %p158
        %s278 = sand.u32 %s148, 1
        %s279 = scalar_lea.sflag [#allocation5], %s278
        %s280 = sand.u32 %s148, 1
        %s281 = smul.addr %s280, 8
        %s282 = scalar_lea.vmem [#allocation4], %s281
        %p283 = pneg %p187
        %p284 = pneg %p184
        %p285 = scmp.lt.s32.totalorder %s25, 1
        %s286 = scalar_select %p285, %s25, 1
        %s287 = smul.addr %s286, 8
        %s288 = scalar_lea.vmem %s6, %s287
        %p289 = pneg %p213
        %p290 = pneg %p210
        %p291 = scmp.lt.s32.totalorder %s25, 1
        %s292 = scalar_select %p291, %s25, 1
        %s293 = smul.addr %s292, 8
        %s294 = scalar_lea.vmem %s7, %s293
        %p295 = scmp.lt.s32.totalorder %s25, 1
        %s296 = scalar_select %p295, %s25, 1
        %s297 = smul.addr %s296, 2
        %s298 = smul.addr %s297, 8
        %s299 = scalar_lea.vmem %s0, %s298
        %p300 = scmp.lt.s32.totalorder %s25, 1
        %s301 = scalar_select %p300, %s25, 1
        %s302 = smul.addr %s301, 8
        %s303 = scalar_lea.vmem %s6, %s302
        %p304 = scmp.lt.s32.totalorder %s25, 1
        %s305 = scalar_select %p304, %s25, 1
        %s306 = smul.addr %s305, 8
        %s307 = scalar_lea.vmem %s7, %s306
        %v308 = vld [vmem:[%s299] sm:$0xff]
        %v309 = vld [vmem:[%s299 + $0x8] sm:$0xf]
        %v310 = vld [vmem:[%s1] sm:$0xff]
        %vm311 = vcmask 97280
        %v313 = vsel %vm311, %v310, 0
        %vm315 = vcmask 1043456
        %v317 = vsel %vm315, %v309, 0
        %319 = vmatprep.subr.mxu0 0.0
        %320 = vmatpush1.msra.mxu0 0.0
        %321 = vmatprep.subr.mxu0 0.0
        %322 = vmatpush1.msra.mxu0 0.0
        %323 = vmatprep.subr.mxu0 0.0
        %324 = vmatpush1.msra.mxu0 0.0
        %325 = vmatprep.subr.mxu0 0.0
        %326 = vmatpush1.msra.mxu0 0.0
        %327 = vmatprep.subr.mxu0 0.0
        %328 = vmatpush1.msra.mxu0 0.0
        %329 = vmatprep.subr.mxu0 0.0
        %330 = vmatpush1.msra.mxu0 0.0
        %331 = vmatprep.subr.mxu0 0.0
        %332 = vmatpush1.msra.mxu0 0.0
        %333 = vmatprep.subr.mxu0 0.0
        %334 = vmatpush1.msra.mxu0 0.0
        %335 = vmatprep.subr.mxu0 0.0
        %336 = vmatpush1.msra.mxu0 0.0
        %337 = vmatprep.subr.mxu0 0.0
        %338 = vmatpush1.msra.mxu0 0.0
        %339 = vmatprep.subr.mxu0 0.0
        %340 = vmatpush1.msra.mxu0 0.0
        %341 = vmatprep.subr.mxu0 0.0
        %342 = vmatpush1.msra.mxu0 0.0
        %343 = vmatprep.subr.mxu0 0.0
        %344 = vmatpush1.msra.mxu0 0.0
        %345 = vmatprep.subr.mxu0 0.0
        %346 = vmatpush1.msra.mxu0 0.0
        %347 = vmatprep.subr.mxu0 0.0
        %348 = vmatpush1.msra.mxu0 %v317
        %349 = vmatprep.subr.mxu0 0.0
        %350 = vmatpush1.msra.mxu0 %v308
        %351 = vmatprep.subr.mxu0 0.0
        %352 = vmatpush2.msra.mxu0 0.0
        %353 = vmatprep.subr.mxu0 0.0
        %354 = vmatpush2.msra.mxu0 0.0
        %355 = vmatprep.subr.mxu0 0.0
        %356 = vmatpush2.msra.mxu0 0.0
        %357 = vmatprep.subr.mxu0 0.0
        %358 = vmatpush2.msra.mxu0 0.0
        %359 = vmatprep.subr.mxu0 0.0
        %360 = vmatpush2.msra.mxu0 0.0
        %361 = vmatprep.subr.mxu0 0.0
        %362 = vmatpush2.msra.mxu0 0.0
        %363 = vmatprep.subr.mxu0 0.0
        %364 = vmatpush2.msra.mxu0 0.0
        %365 = vmatprep.subr.mxu0 0.0
        %366 = vmatpush2.msra.mxu0 0.0
        %367 = vmatprep.subr.mxu0 0.0
        %368 = vmatpush2.msra.mxu0 0.0
        %369 = vmatprep.subr.mxu0 0.0
        %370 = vmatpush2.msra.mxu0 0.0
        %371 = vmatprep.subr.mxu0 0.0
        %372 = vmatpush2.msra.mxu0 0.0
        %373 = vmatprep.subr.mxu0 0.0
        %374 = vmatpush2.msra.mxu0 0.0
        %375 = vmatprep.subr.mxu0 0.0
        %376 = vmatpush2.msra.mxu0 0.0
        %377 = vmatprep.subr.mxu0 0.0
        %378 = vmatpush2.msra.mxu0 0.0
        %379 = vmatprep.subr.mxu0 0.0
        %380 = vmatpush2.msra.mxu0 0.0
        %381 = vmatprep.subr.mxu0 0.0
        %382 = vmatpush2.msra.mxu0 0.0
        %383 = vmatprep.mubr.f32.mxu0 0.0
        %384 = vmatmul.mubr.f32.gmra.mxu0 %v313
        %v385 = vpop.f32.mrf.mxu0
        %v386 = vadd.f32 0.0, %v385
        %v387 = vpop.f32.mrf.mxu0
        %388 = vdwg.mxu0
        %389 = vst [vmem:[%s275] sm:$0xff] %v386
        %390 = vadd.xlane.f32.xlu0 %v386
        %v391 = vpop.xlane.xlu0 %390
        %vm392 = vcmask 7168
        %393 = vst.msk [vmem:[%s303] sm:$0xff] %vm392, %v391
        %v394 = vmul.f32 %v386, %v386
        %395 = vadd.xlane.f32.xlu0 %v394
        %v396 = vpop.xlane.xlu0 %395
        %397 = vst.msk [vmem:[%s307] sm:$0xff] %vm392, %v396
        %v398 = vld [vmem:[%s2] sm:$0xff]
        %v399 = vld [vmem:[%s3] sm:$0xff]
        %401 = vset.pattern.permute.xlu0 0
        %402 = vperm.xlu0 %401, %v399
        %v403 = vpop.permute.xlu0 %402
        %vm405 = vcmask 31744
        %v407 = vsel %vm405, %v398, 0
        %409 = vmatprep.subr.mxu0 0.0
        %410 = vmatpush1.msra.mxu0 0.0
        %411 = vmatprep.subr.mxu0 0.0
        %412 = vmatpush1.msra.mxu0 0.0
        %413 = vmatprep.subr.mxu0 0.0
        %414 = vmatpush1.msra.mxu0 0.0
        %415 = vmatprep.subr.mxu0 0.0
        %416 = vmatpush1.msra.mxu0 0.0
        %417 = vmatprep.subr.mxu0 0.0
        %418 = vmatpush1.msra.mxu0 0.0
        %419 = vmatprep.subr.mxu0 0.0
        %420 = vmatpush1.msra.mxu0 0.0
        %421 = vmatprep.subr.mxu0 0.0
        %422 = vmatpush1.msra.mxu0 0.0
        %423 = vmatprep.subr.mxu0 0.0
        %424 = vmatpush1.msra.mxu0 0.0
        %425 = vmatprep.subr.mxu0 0.0
        %426 = vmatpush1.msra.mxu0 0.0
        %427 = vmatprep.subr.mxu0 0.0
        %428 = vmatpush1.msra.mxu0 0.0
        %429 = vmatprep.subr.mxu0 0.0
        %430 = vmatpush1.msra.mxu0 0.0
        %431 = vmatprep.subr.mxu0 0.0
        %432 = vmatpush1.msra.mxu0 0.0
        %433 = vmatprep.subr.mxu0 0.0
        %434 = vmatpush1.msra.mxu0 0.0
        %435 = vmatprep.subr.mxu0 0.0
        %436 = vmatpush1.msra.mxu0 0.0
        %437 = vmatprep.subr.mxu0 0.0
        %438 = vmatpush1.msra.mxu0 0.0
        %439 = vmatprep.subr.mxu0 0.0
        %440 = vmatpush1.msra.mxu0 %v317
        %441 = vmatprep.subr.mxu0 0.0
        %442 = vmatpush2.msra.mxu0 0.0
        %443 = vmatprep.subr.mxu0 0.0
        %444 = vmatpush2.msra.mxu0 0.0
        %445 = vmatprep.subr.mxu0 0.0
        %446 = vmatpush2.msra.mxu0 0.0
        %447 = vmatprep.subr.mxu0 0.0
        %448 = vmatpush2.msra.mxu0 0.0
        %449 = vmatprep.subr.mxu0 0.0
        %450 = vmatpush2.msra.mxu0 0.0
        %451 = vmatprep.subr.mxu0 0.0
        %452 = vmatpush2.msra.mxu0 0.0
        %453 = vmatprep.subr.mxu0 0.0
        %454 = vmatpush2.msra.mxu0 0.0
        %455 = vmatprep.subr.mxu0 0.0
        %456 = vmatpush2.msra.mxu0 0.0
        %457 = vmatprep.subr.mxu0 0.0
        %458 = vmatpush2.msra.mxu0 0.0
        %459 = vmatprep.subr.mxu0 0.0
        %460 = vmatpush2.msra.mxu0 0.0
        %461 = vmatprep.subr.mxu0 0.0
        %462 = vmatpush2.msra.mxu0 0.0
        %463 = vmatprep.subr.mxu0 0.0
        %464 = vmatpush2.msra.mxu0 0.0
        %465 = vmatprep.subr.mxu0 0.0
        %466 = vmatpush2.msra.mxu0 0.0
        %467 = vmatprep.subr.mxu0 0.0
        %468 = vmatpush2.msra.mxu0 0.0
        %469 = vmatprep.subr.mxu0 0.0
        %470 = vmatpush2.msra.mxu0 0.0
        %471 = vmatprep.subr.mxu0 0.0
        %472 = vmatpush2.msra.mxu0 0.0
        %473 = vmatprep.mubr.f32.mxu0 0.0
        %474 = vmatmul.mubr.f32.gmra.mxu0 %v407
        %v475 = vpop.f32.mrf.mxu0
        %v476 = vadd.f32 %v403, %v475
        %v477 = vpop.f32.mrf.mxu0
        %478 = vdwg.mxu0
        %479 = vst [vmem:[%s282] sm:$0xff] %v476
        %s480 = sand.u32 %s122, 1
        %s481 = scalar_lea.sflag [#allocation3], %s480
        %s482 = sand.u32 %s122, 1
        %s483 = smul.addr %s482, 8
        %s484 = scalar_lea.vmem [#allocation2], %s483
        %s485 = sand.u32 %s148, 1
        %s486 = scalar_lea.sflag [#allocation5], %s485
        %s487 = sand.u32 %s148, 1
        %s488 = smul.addr %s487, 8
        %s489 = scalar_lea.vmem [#allocation4], %s488
        %p490 = scmp.lt.s32.totalorder %s25, 1
        %s491 = scalar_select %p490, %s25, 1
        %s492 = smul.addr %s491, 8
        %s493 = scalar_lea.vmem %s6, %s492
        %p494 = scmp.lt.s32.totalorder %s25, 1
        %s495 = scalar_select %p494, %s25, 1
        %s496 = smul.addr %s495, 8
        %s497 = scalar_lea.vmem %s7, %s496
        // Predicated region
        $region37: #{tpu_custom_call.1} parent=35 // pred_check
          %p498 = pneg %p132
        $region38: #{tpu_custom_call.1} parent=35 // pred_check_branch
          %500 = sbr.rel (%p498) target = $region40
        $region39: #{tpu_custom_call.1} parent=35 // pred_region
          %s502 = ssub.s32 128, 128
          %503 = vsyncadd %s481, %s502
          %s504 = smul.addr %s25, 128
          %s505 = scalar_lea.hbm %s4, %s504
          %s507 = sshll.u32 %s484, 4
          %s508 = int_to_ptr.vmem [resolvable:$true] %s507
          %510 = dma.vmem_to_hbm [thread:$0]  %s508, 128, %s505, %s481
        $region40: #{tpu_custom_call.1} parent=35 // pred_fallthru
          _
        // Predicated region
        $region41: #{tpu_custom_call.1} parent=35 // pred_check
          %p511 = pneg %p158
        $region42: #{tpu_custom_call.1} parent=35 // pred_check_branch
          %513 = sbr.rel (%p511) target = $region44
        $region43: #{tpu_custom_call.1} parent=35 // pred_region
          %s515 = ssub.s32 128, 128
          %516 = vsyncadd %s486, %s515
          %s517 = smul.addr %s25, 128
          %s518 = scalar_lea.hbm %s5, %s517
          %s520 = sshll.u32 %s489, 4
          %s521 = int_to_ptr.vmem [resolvable:$true] %s520
          %523 = dma.vmem_to_hbm [thread:$0]  %s521, 128, %s518, %s486
        $region44: #{tpu_custom_call.1} parent=35 // pred_fallthru
          _
        // Predicated region
        $region45: #{tpu_custom_call.1} parent=35 // pred_check
          %p524 = pneg %p184
        $region46: #{tpu_custom_call.1} parent=35 // pred_check_branch
          %526 = sbr.rel (%p524) target = $region48
        $region47: #{tpu_custom_call.1} parent=35 // pred_region
          _
        $region48: #{tpu_custom_call.1} parent=35 // pred_fallthru
          _
        // Predicated region
        $region49: #{tpu_custom_call.1} parent=35 // pred_check
          %p527 = pneg %p210
        $region50: #{tpu_custom_call.1} parent=35 // pred_check_branch
          %529 = sbr.rel (%p527) target = $region52
        $region51: #{tpu_custom_call.1} parent=35 // pred_region
          _
        $region52: #{tpu_custom_call.1} parent=35 // pred_fallthru
          _
      $region36: #{tpu_custom_call.1} parent=5 // pred_fallthru
        _
      %p530 = scmp.le.s32.totalorder 2, %s20
      // Predicated region
      $region53: #{tpu_custom_call.1} parent=5 // pred_check
        %p531 = pneg %p530
      $region54: #{tpu_custom_call.1} parent=5 // pred_check_branch
        %533 = sbr.rel (%p531) target = $region56
      $region55: #{tpu_custom_call.1} parent=5 // pred_region
        %s534 = ssub.s32 %s20, 2
        // Predicated region
        $region57: #{tpu_custom_call.1} parent=55 // pred_check
          %p535 = pneg %p138
        $region58: #{tpu_custom_call.1} parent=55 // pred_check_branch
          %537 = sbr.rel (%p535) target = $region60
        $region59: #{tpu_custom_call.1} parent=55 // pred_region
          %s538 = sand.u32 %s123, 1
          %s539 = scalar_lea.sflag [#allocation3], %s538
          %s540 = sand.u32 %s123, 1
          %s541 = smul.addr %s540, 8
          %s542 = scalar_lea.vmem [#allocation2], %s541
          %543 = dma.done %s539, 128
        $region60: #{tpu_custom_call.1} parent=55 // pred_fallthru
          _
        // Predicated region
        $region61: #{tpu_custom_call.1} parent=55 // pred_check
          %p544 = pneg %p164
        $region62: #{tpu_custom_call.1} parent=55 // pred_check_branch
          %546 = sbr.rel (%p544) target = $region64
        $region63: #{tpu_custom_call.1} parent=55 // pred_region
          %s547 = sand.u32 %s149, 1
          %s548 = scalar_lea.sflag [#allocation5], %s547
          %s549 = sand.u32 %s149, 1
          %s550 = smul.addr %s549, 8
          %s551 = scalar_lea.vmem [#allocation4], %s550
          %552 = dma.done %s548, 128
        $region64: #{tpu_custom_call.1} parent=55 // pred_fallthru
          _
        // Predicated region
        $region65: #{tpu_custom_call.1} parent=55 // pred_check
          %p553 = pneg %p190
        $region66: #{tpu_custom_call.1} parent=55 // pred_check_branch
          %555 = sbr.rel (%p553) target = $region68
        $region67: #{tpu_custom_call.1} parent=55 // pred_region
          %p556 = scmp.lt.s32.totalorder %s26, 1
          %s557 = scalar_select %p556, %s26, 1
          %s558 = smul.addr %s557, 8
          %s559 = scalar_lea.vmem %s6, %s558
        $region68: #{tpu_custom_call.1} parent=55 // pred_fallthru
          _
        // Predicated region
        $region69: #{tpu_custom_call.1} parent=55 // pred_check
          %p560 = pneg %p216
        $region70: #{tpu_custom_call.1} parent=55 // pred_check_branch
          %562 = sbr.rel (%p560) target = $region72
        $region71: #{tpu_custom_call.1} parent=55 // pred_region
          %p563 = scmp.lt.s32.totalorder %s26, 1
          %s564 = scalar_select %p563, %s26, 1
          %s565 = smul.addr %s564, 8
          %s566 = scalar_lea.vmem %s7, %s565
        $region72: #{tpu_custom_call.1} parent=55 // pred_fallthru
          _
      $region56: #{tpu_custom_call.1} parent=5 // pred_fallthru
        _
    $region6: #{tpu_custom_call.1} parent=1 // loop_footer
      %s24 = sadd.s32 1, %s20
    $region7: #{tpu_custom_call.1} parent=1 // loop_footer_branch
      %19 = sbr.rel target = $region3
    $region8: #{tpu_custom_call.1} parent=1 // loop_exit
      _
    %567 = vsyncpa [#allocation3], 1
    %s568 = scalar_lea.sflag [#allocation3], 1
    %569 = vsyncpa %s568, 1
    %570 = vsyncpa [#allocation5], 1
    %s571 = scalar_lea.sflag [#allocation5], 1
    %572 = vsyncpa %s571, 1

</llo_original>
